<compile_context>
chip_gen: v6e
topology: v6e:2x2x1
jax: 0.10.0
libtpu: 0.0.40
codegen_flags: <defaults>
</compile_context>

<pallas_src>
import functools

import jax
import jax.numpy as jnp
from jax.experimental import pallas as pl
from jax.experimental.pallas import tpu as pltpu


def _add_kernel(x_ref, emb_ref, o_ref):
    # Eval-mode path (dropout is identity): broadcast-add over the row tile.
    o_ref[...] = x_ref[...] + emb_ref[...]


def _add_dropout_kernel(x_ref, emb_ref, mask_ref, o_ref, *, scale):
    # Training-mode path: inverted dropout. mask is 0/1 in x's dtype.
    y = x_ref[...] + emb_ref[...]
    o_ref[...] = (y * mask_ref[...] * scale).astype(o_ref.dtype)


def _choose_tiles(rows, cols, dtype):
    """Pick lane-dense, VMEM-friendly tiles (~2 MiB per x tile)."""
    itemsize = jnp.dtype(dtype).itemsize
    # Lane-dense column tile: multiple of 128 when possible, else full extent
    # (a block dim equal to the full array dim is always legal).
    if cols % 128 == 0:
        col_tile = min(cols, 2048)
        while cols % col_tile != 0:
            col_tile -= 128
    else:
        col_tile = cols
    # Row tile sized so the x tile is ~2 MiB (double-buffered x/out/mask + emb
    # stays well under the 32 MiB scoped VMEM limit on every generation).
    target_elems = (2 * 1024 * 1024) // itemsize
    target_rows = max(1, target_elems // col_tile)
    if target_rows >= rows or rows <= 8:
        row_tile = rows
    else:
        row_tile = max(8, (target_rows // 8) * 8)  # keep sublane alignment
    return row_tile, col_tile


def general_positional_embedding(x, embedding, *, p=0.1, training=False, rng_key=None):
    """x: (B, C, L); embedding: (1, C, L). Returns dropout(x + embedding)."""
    B, C, L = x.shape
    assert embedding.shape == (1, C, L)

    cols = C * L
    x2 = x.reshape(B, cols)          # lane-dense 2-D view
    emb2 = embedding.reshape(1, cols)

    row_tile, col_tile = _choose_tiles(B, cols, x.dtype)
    grid = (pl.cdiv(B, row_tile), pl.cdiv(cols, col_tile))

    x_spec = pl.BlockSpec((row_tile, col_tile), lambda i, j: (i, j))
    emb_spec = pl.BlockSpec((1, col_tile), lambda i, j: (0, j))
    out_spec = pl.BlockSpec((row_tile, col_tile), lambda i, j: (i, j))
    out_shape = jax.ShapeDtypeStruct((B, cols), x.dtype)
    cparams = pltpu.CompilerParams(
        dimension_semantics=("parallel", "parallel"),
        vmem_limit_bytes=32 * 1024 * 1024,
    )

    if (not training) or p == 0.0:
        # NOTE: a standalone broadcast-add is something XLA fuses at the HBM
        # roofline; keep the Pallas path here per the exercise, but this branch
        # is a candidate for plain `x + embedding` in a real model.
        out2 = pl.pallas_call(
            _add_kernel,
            out_shape=out_shape,
            grid=grid,
            in_specs=[x_spec, emb_spec],
            out_specs=out_spec,
            compiler_params=cparams,
        )(x2, emb2)
        return out2.reshape(B, C, L)

    if p >= 1.0:
        # Guard the p -> 1.0 edge case (scale would overflow).
        return jnp.zeros_like(x)

    if rng_key is None:
        rng_key = jax.random.PRNGKey(0)
    keep = jax.random.bernoulli(rng_key, 1.0 - p, (B, cols)).astype(x.dtype)
    scale = 1.0 / (1.0 - p)

    kernel = functools.partial(_add_dropout_kernel, scale=scale)
    out2 = pl.pallas_call(
        kernel,
        out_shape=out_shape,
        grid=grid,
        in_specs=[x_spec, emb_spec, x_spec],
        out_specs=out_spec,
        compiler_params=cparams,
    )(x2, emb2, keep)
    return out2.reshape(B, C, L)


if __name__ == "__main__":
    key = jax.random.PRNGKey(0)
    kx, ke, kd = jax.random.split(key, 3)

    B, C, L = 2, 32, 16  # batch, embedding_dim, max_length
    x = jax.random.normal(kx, (B, C, L), dtype=jnp.float32)
    # The PyTorch module zero-initialises the embedding parameter; use a small
    # deterministic non-zero init so the broadcast-add is exercised.
    embedding = 0.01 * jax.random.normal(ke, (1, C, L), dtype=jnp.float32)

    ref = x + embedding

    # Eval mode (dropout == identity): exact reference check.
    out_eval = general_positional_embedding(x, embedding, p=0.1, training=False)
    jax.block_until_ready(out_eval)
    assert jnp.allclose(out_eval, ref, atol=1e-6, rtol=1e-6), "eval-mode mismatch"

    # Training mode (inverted dropout, mask derived deterministically from kd):
    # rebuild the same mask in the test and compare exactly.
    p = 0.1
    out_train = general_positional_embedding(
        x, embedding, p=p, training=True, rng_key=kd
    )
    jax.block_until_ready(out_train)
    keep = (
        jax.random.bernoulli(kd, 1.0 - p, (B, C * L))
        .astype(x.dtype)
        .reshape(B, C, L)
    )
    ref_train = ref * keep / (1.0 - p)
    assert jnp.allclose(out_train, ref_train, atol=1e-5, rtol=1e-5), (
        "training-mode mismatch"
    )

    print("KERNEL_OK")
</pallas_src>

<mosaic_0001>
module attributes {stable_mosaic.version = 11 : i64} {
  func.func @_add_kernel(%arg0: i32, %arg1: i32, %arg2: memref<2x512xf32, #tpu.memory_space<vmem>>, %arg3: memref<1x512xf32, #tpu.memory_space<vmem>>, %arg4: memref<2x512xf32, #tpu.memory_space<vmem>>) attributes {dimension_semantics = [#tpu.dimension_semantics<parallel>, #tpu.dimension_semantics<parallel>], iteration_bounds = array<i64: 1, 1>, scalar_prefetch = 0 : i64, scratch_operands = 0 : i64, tpu.core_type = #tpu.core_type<tc>, window_params = [{transform_indices = @transform_0, window_bounds = array<i64: 2, 512>}, {transform_indices = @transform_1, window_bounds = array<i64: 1, 512>}, {transform_indices = @transform_2, window_bounds = array<i64: 2, 512>}]} {
    %c0 = arith.constant 0 : index
    %c0_0 = arith.constant 0 : index
    %0 = vector.load %arg2[%c0, %c0_0] : memref<2x512xf32, #tpu.memory_space<vmem>>, vector<2x512xf32>
    %c0_1 = arith.constant 0 : index
    %c0_2 = arith.constant 0 : index
    %1 = vector.load %arg3[%c0_1, %c0_2] : memref<1x512xf32, #tpu.memory_space<vmem>>, vector<1x512xf32>
    %2 = vector.broadcast %1 : vector<1x512xf32> to vector<2x512xf32>
    %3 = arith.addf %0, %2 : vector<2x512xf32>
    %c0_3 = arith.constant 0 : index
    %c0_4 = arith.constant 0 : index
    %4 = vector.load %arg4[%c0_3, %c0_4] : memref<2x512xf32, #tpu.memory_space<vmem>>, vector<2x512xf32>
    tpu.vector_store %arg4[%c0_3, %c0_4], %3 {strides = array<i32>} : memref<2x512xf32, #tpu.memory_space<vmem>>, vector<2x512xf32>,
    return
  }
  func.func @transform_0(%arg0: i32, %arg1: i32) -> (i32, i32) {
    %c0_i32 = arith.constant 0 : i32
    return %arg0, %arg1 : i32, i32
  }
  func.func @transform_1(%arg0: i32, %arg1: i32) -> (i32, i32) {
    %c0_i32 = arith.constant 0 : i32
    %c0_i32_0 = arith.constant 0 : i32
    return %c0_i32, %arg1 : i32, i32
  }
  func.func @transform_2(%arg0: i32, %arg1: i32) -> (i32, i32) {
    %c0_i32 = arith.constant 0 : i32
    return %arg0, %arg1 : i32, i32
  }
}

</mosaic_0001>

<llo_original>
// kernel: tpu_custom_call.1
$region0: #{tpu_custom_call.1}
  #allocation0 [shape = 'u32[]', space=smem, size = 0x4, offset = 0x4, fixed_abs, tag = 'smem constant byte address 0x4 - core index']
  #allocation1 [shape = 'u32[144,128]{1,0:T(1,128)}', space=vmem, size = 0x12000, scoped, tag = 'internal scratch']
  %s0 = inlined_call_operand.hbm [shape: f32[2,512], index: 0, kind: input, shape index: {}]
  %s1 = inlined_call_operand.hbm [shape: f32[1,512], index: 1, kind: input, shape index: {}]
  %s2 = inlined_call_operand.hbm [shape: f32[2,512], index: 2, kind: output, shape index: {}]
  %s3 = sld [smem:[#allocation0]]
  $region26: #{tpu_custom_call.1} parent=0
    _
  %s5 = ssub.s32 1, %s3
  %s6 = scalar_select 0, %s5, %s3
  $region1: #{tpu_custom_call.1} parent=0
    #allocation2 [shape = 'u8[4096]{0}', space=vmem, size = 0x1000, scoped, tag = 'input window, operand 0, single buffered']
    #allocation3 [shape = 's32[1]{0}', space=sflag, size = 0x4, scoped, tag = 'scoped memory for tpu_custom_call.1']
    #allocation4 [shape = 's32[1]{0}', space=sflag, size = 0x4, scoped, tag = 'scoped memory for tpu_custom_call.1']
    #allocation5 [shape = 'u8[2048]{0}', space=vmem, size = 0x800, scoped, tag = 'input window, operand 1, single buffered']
    #allocation6 [shape = 's32[1]{0}', space=sflag, size = 0x4, scoped, tag = 'scoped memory for tpu_custom_call.1']
    #allocation7 [shape = 'u8[4096]{0}', space=vmem, size = 0x1000, scoped, tag = 'output window, operand 0, single buffered']
    %7 = vsyncpa [#allocation3], 0
    %8 = vsyncpa [#allocation6], 0
    %9 = vsyncpa [#allocation4], 0
    // Predicated region
    $region2: #{tpu_custom_call.1} parent=1 // pred_check
      _
    $region3: #{tpu_custom_call.1} parent=1 // pred_check_branch
      %11 = sbr.rel (0) target = $region5
    $region4: #{tpu_custom_call.1} parent=1 // pred_region
      %s13 = ssub.s32 128, 128
      %14 = vsyncadd [#allocation3], %s13
      %s16 = sshll.u32 [#allocation2], 4
      %s17 = int_to_ptr.vmem [resolvable:$true] %s16
      %19 = dma.hbm_to_vmem [thread:$0]  %s0, 128, %s17, [#allocation3]
    $region5: #{tpu_custom_call.1} parent=1 // pred_fallthru
      _
    // Predicated region
    $region6: #{tpu_custom_call.1} parent=1 // pred_check
      _
    $region7: #{tpu_custom_call.1} parent=1 // pred_check_branch
      %21 = sbr.rel (0) target = $region9
    $region8: #{tpu_custom_call.1} parent=1 // pred_region
      %s23 = ssub.s32 64, 64
      %24 = vsyncadd [#allocation6], %s23
      %s26 = sshll.u32 [#allocation5], 4
      %s27 = int_to_ptr.vmem [resolvable:$true] %s26
      %29 = dma.hbm_to_vmem [thread:$0]  %s1, 64, %s27, [#allocation6]
    $region9: #{tpu_custom_call.1} parent=1 // pred_fallthru
      _
    // Predicated region
    $region10: #{tpu_custom_call.1} parent=1 // pred_check
      _
    $region11: #{tpu_custom_call.1} parent=1 // pred_check_branch
      %31 = sbr.rel (0) target = $region13
    $region12: #{tpu_custom_call.1} parent=1 // pred_region
      %32 = dma.done [#allocation3], 128
    $region13: #{tpu_custom_call.1} parent=1 // pred_fallthru
      _
    // Predicated region
    $region14: #{tpu_custom_call.1} parent=1 // pred_check
      _
    $region15: #{tpu_custom_call.1} parent=1 // pred_check_branch
      %34 = sbr.rel (0) target = $region17
    $region16: #{tpu_custom_call.1} parent=1 // pred_region
      %35 = dma.done [#allocation6], 64
    $region17: #{tpu_custom_call.1} parent=1 // pred_fallthru
      _
    %v36 = vld [vmem:[#allocation2] sm:$0xff]
    %v37 = vld [vmem:[#allocation5] sm:$0xf]
    %v39 = vlaneseq
    %v40 = vshrl.u32 %v39, 7
    %v41 = vsub.s32 0, %v40
    %v42 = vrot.slane %v37, %v41
    %v43 = vlaneseq
    %v44 = vshrl.u32 %v43, 7
    %v45 = vsub.s32 1, %v44
    %v46 = vrot.slane %v37, %v45
    %v47 = vlaneseq
    %v48 = vshrl.u32 %v47, 7
    %v49 = vsub.s32 2, %v48
    %v50 = vrot.slane %v37, %v49
    %v51 = vlaneseq
    %v52 = vshrl.u32 %v51, 7
    %v53 = vsub.s32 3, %v52
    %v54 = vrot.slane %v37, %v53
    %v55 = vcombine.low %v42, %v46
    %v56 = vcombine.low %v50, %v54
    %v58 = vunpack.c.l.s4 1983009808
    %v59 = vunpack.c.0.s8 %v58
    %v60 = vlaneseq
    %v61 = vshrl.u32 %v60, 7
    %v62 = vsub.s32 %v59, %v61
    %v63 = vrot.slane %v55, %v62
    %v65 = vunpack.c.l.s4 1983009808
    %v66 = vunpack.c.0.s8 %v65
    %v67 = vlaneseq
    %v68 = vshrl.u32 %v67, 7
    %v69 = vsub.s32 %v66, %v68
    %v70 = vrot.slane %v56, %v69
    %v71 = vcombine.low %v63, %v70
    %v73 = vadd.f32 %v36, %v71
    %74 = vst [vmem:[#allocation7] sm:$0xff] %v73
    // Predicated region
    $region18: #{tpu_custom_call.1} parent=1 // pred_check
      _
    $region19: #{tpu_custom_call.1} parent=1 // pred_check_branch
      %76 = sbr.rel (0) target = $region21
    $region20: #{tpu_custom_call.1} parent=1 // pred_region
      %s78 = ssub.s32 128, 128
      %79 = vsyncadd [#allocation4], %s78
      %s81 = sshll.u32 [#allocation7], 4
      %s82 = int_to_ptr.vmem [resolvable:$true] %s81
      %84 = dma.vmem_to_hbm [thread:$0]  %s82, 128, %s2, [#allocation4]
    $region21: #{tpu_custom_call.1} parent=1 // pred_fallthru
      _
    // Predicated region
    $region22: #{tpu_custom_call.1} parent=1 // pred_check
      _
    $region23: #{tpu_custom_call.1} parent=1 // pred_check_branch
      %86 = sbr.rel (0) target = $region25
    $region24: #{tpu_custom_call.1} parent=1 // pred_region
      %87 = dma.done [#allocation4], 128
    $region25: #{tpu_custom_call.1} parent=1 // pred_fallthru
      _
    %88 = vsyncpa [#allocation3], 1
    %89 = vsyncpa [#allocation6], 1
    %90 = vsyncpa [#allocation4], 1

</llo_original>
